<compile_context>
chip_gen: v5e
topology: v5e:2x2
jax: 0.10.0
libtpu: 0.0.40
codegen_flags: <defaults>
</compile_context>

<pallas_src>
import math

import jax
import jax.numpy as jnp
import numpy as np
from jax import lax
from jax.experimental import pallas as pl
from jax.experimental.pallas import tpu as pltpu

_LANE = 128
_F_PAD = 128          # padded feature axis for the segment-sum matmul


def _round_up(x, m):
    return ((x + m - 1) // m) * m


def _make_kernel(*, batch_size, latent_dim, num_features,
                 reconstruction_weight, kl_weight, has_categorical):
    # Plain Python scalars -> inlined literals (no captured jax-Array consts).
    inv_b = 1.0 / float(batch_size)
    kl_denom = 1.0 / float(batch_size * latent_dim)
    kl_scale = (1.0 / math.log(latent_dim)) if latent_dim > 8 else 1.0
    rec_w = float(reconstruction_weight)
    kl_w = float(kl_weight)
    nf = int(num_features)

    def _finalize(beta_ref, out_ref, acc_ref):
        numerical_loss = acc_ref[0] * inv_b
        categorical_loss = acc_ref[1] * inv_b
        kl_loss = (-0.5 * acc_ref[2]) * kl_denom * kl_scale
        total = rec_w * (numerical_loss + categorical_loss) \
            + beta_ref[0] * kl_w * kl_loss
        out_ref[0] = total
        out_ref[1] = numerical_loss
        out_ref[2] = categorical_loss
        out_ref[3] = kl_loss

    if has_categorical:
        def kernel(beta_ref, num_dec_ref, num_tgt_ref, cat_pred_ref,
                   cat_tgt_ref, seg_ref, mu_ref, logvar_ref, out_ref, acc_ref):
            step = pl.program_id(0)

            @pl.when(step == 0)
            def _():
                acc_ref[0] = 0.0
                acc_ref[1] = 0.0
                acc_ref[2] = 0.0

            # ---- numerical: sum-of-squared-errors (MSE, reduction='sum') ----
            d = (num_dec_ref[...].astype(jnp.float32)
                 - num_tgt_ref[...].astype(jnp.float32))
            num_partial = jnp.sum(d * d)

            # ---- categorical: collapsed masked log-softmax cross-entropy ----
            # per (row, feature):  log(sum_seg clip(p)) - log(sum_seg onehot*clip(p))
            # segment sums via one MXU matmul with the static 0/1 segment matrix.
            p_safe = jnp.clip(cat_pred_ref[...].astype(jnp.float32),
                              1e-8, 1.0 - 1e-8)
            tgt = cat_tgt_ref[...].astype(jnp.float32)
            seg = seg_ref[...]
            s_all = jnp.dot(p_safe, seg, preferred_element_type=jnp.float32)
            s_tgt = jnp.dot(tgt * p_safe, seg,
                            preferred_element_type=jnp.float32)
            lane = lax.broadcasted_iota(jnp.int32, s_all.shape, 1)
            # padded feature columns get +1 so log(1) - log(1) == 0
            pad_bias = jnp.where(lane < nf, 0.0, 1.0)
            cat_partial = jnp.sum(jnp.log(s_all + pad_bias)
                                  - jnp.log(s_tgt + pad_bias))

            # ---- KL: sum(1 + logvar - mu^2 - exp(logvar)) ----
            mu = mu_ref[...].astype(jnp.float32)
            lv = logvar_ref[...].astype(jnp.float32)
            kl_partial = jnp.sum(1.0 + lv - mu * mu - jnp.exp(lv))

            acc_ref[0] = acc_ref[0] + num_partial
            acc_ref[1] = acc_ref[1] + cat_partial
            acc_ref[2] = acc_ref[2] + kl_partial

            @pl.when(step == pl.num_programs(0) - 1)
            def _():
                _finalize(beta_ref, out_ref, acc_ref)
    else:
        def kernel(beta_ref, num_dec_ref, num_tgt_ref, mu_ref, logvar_ref,
                   out_ref, acc_ref):
            step = pl.program_id(0)

            @pl.when(step == 0)
            def _():
                acc_ref[0] = 0.0
                acc_ref[1] = 0.0
                acc_ref[2] = 0.0

            d = (num_dec_ref[...].astype(jnp.float32)
                 - num_tgt_ref[...].astype(jnp.float32))
            num_partial = jnp.sum(d * d)

            mu = mu_ref[...].astype(jnp.float32)
            lv = logvar_ref[...].astype(jnp.float32)
            kl_partial = jnp.sum(1.0 + lv - mu * mu - jnp.exp(lv))

            acc_ref[0] = acc_ref[0] + num_partial
            acc_ref[2] = acc_ref[2] + kl_partial

            @pl.when(step == pl.num_programs(0) - 1)
            def _():
                _finalize(beta_ref, out_ref, acc_ref)

    return kernel


class EnhancedVAELossPallas:
    """JAX/Pallas port of EnhancedVAELoss (forward pass)."""

    def __init__(self, categorical_cardinality, num_numerical, latent_dim=2,
                 reconstruction_weight=1.0, kl_weight=1.0):
        self.categorical_cardinality = categorical_cardinality
        self.num_numerical = num_numerical
        self.latent_dim = latent_dim
        self.reconstruction_weight = reconstruction_weight
        self.kl_weight = kl_weight
        if latent_dim > 16:
            self.kl_weight *= 0.5
        elif latent_dim <= 2:
            self.kl_weight *= 1.5

    def __call__(self, decoded_outputs, target, mu, logvar, beta=1.0):
        batch = target.shape[0]
        num_dec = decoded_outputs['numerical']          # native dtype
        num_tgt = target[:, :self.num_numerical]

        feats = [f for f in self.categorical_cardinality if f in decoded_outputs]
        cards = [int(self.categorical_cardinality[f]['cardinality']) for f in feats]
        has_cat = len(feats) > 0

        # --- batch tiling: grid over batch rows (accumulator pattern) ---
        tb = min(512, _round_up(batch, 8))
        b_pad = _round_up(batch, tb)
        grid = (b_pad // tb,)

        def pad_rows(x, value=0.0):
            if b_pad == batch:
                return x
            return jnp.pad(x, ((0, b_pad - batch), (0, 0)),
                           constant_values=value)

        num_dec_p = pad_rows(num_dec)
        num_tgt_p = pad_rows(num_tgt)
        mu_p = pad_rows(mu)
        logvar_p = pad_rows(logvar)

        beta_arr = jnp.asarray([beta], jnp.float32)
        smem = pl.BlockSpec(memory_space=pltpu.MemorySpace.SMEM)

        dn = num_dec_p.shape[1]
        ld = mu_p.shape[1]

        kernel = _make_kernel(batch_size=batch, latent_dim=self.latent_dim,
                              num_features=len(feats),
                              reconstruction_weight=self.reconstruction_weight,
                              kl_weight=self.kl_weight,
                              has_categorical=has_cat)

        head_specs = [
            smem,                                          # beta (SMEM scalar)
            pl.BlockSpec((tb, dn), lambda i: (i, 0)),      # numerical decoded
            pl.BlockSpec((tb, dn), lambda i: (i, 0)),      # numerical target
        ]
        tail_specs = [
            pl.BlockSpec((tb, ld), lambda i: (i, 0)),      # mu
            pl.BlockSpec((tb, ld), lambda i: (i, 0)),      # logvar
        ]

        if has_cat:
            c_total = int(sum(cards))
            c_pad = _round_up(c_total, _LANE)
            # Lane-dense concat along class axis; targets reuse the contiguous
            # slice of `target` (no per-feature dynamic-update-slice loop).
            cat_pred = jnp.concatenate([decoded_outputs[f] for f in feats], axis=1)
            cat_tgt = target[:, self.num_numerical:self.num_numerical + c_total]
            cat_pred = jnp.pad(cat_pred, ((0, 0), (0, c_pad - c_total)))
            cat_tgt = jnp.pad(cat_tgt, ((0, 0), (0, c_pad - c_total)))
            cat_pred = pad_rows(cat_pred)
            # padded batch rows of the target are all-ones so they contribute 0
            cat_tgt = pad_rows(cat_tgt, value=1.0)

            # Static 0/1 segment-membership matrix [c_pad, F_PAD]
            seg_np = np.zeros((c_pad, _F_PAD), np.float32)
            off = 0
            for i, c in enumerate(cards):
                seg_np[off:off + c, i] = 1.0
                off += c
            seg = jnp.asarray(seg_np)

            in_specs = head_specs + [
                pl.BlockSpec((tb, c_pad), lambda i: (i, 0)),       # cat pred
                pl.BlockSpec((tb, c_pad), lambda i: (i, 0)),       # cat target
                pl.BlockSpec((c_pad, _F_PAD), lambda i: (0, 0)),   # seg (resident)
            ] + tail_specs
            args = (beta_arr, num_dec_p, num_tgt_p, cat_pred, cat_tgt, seg,
                    mu_p, logvar_p)
        else:
            in_specs = head_specs + tail_specs
            args = (beta_arr, num_dec_p, num_tgt_p, mu_p, logvar_p)

        out = pl.pallas_call(
            kernel,
            out_shape=jax.ShapeDtypeStruct((4,), jnp.float32),
            grid=grid,
            in_specs=in_specs,
            out_specs=smem,
            scratch_shapes=[pltpu.SMEM((4,), jnp.float32)],
            compiler_params=pltpu.CompilerParams(
                dimension_semantics=("arbitrary",)),
        )(*args)
        return out[0], out[1], out[2], out[3]


def _reference_loss(module, decoded_outputs, target, mu, logvar, beta=1.0):
    """Pure-JAX reference mirroring the PyTorch forward, for verification."""
    b = target.shape[0]
    nn_ = module.num_numerical
    num_loss = jnp.sum((decoded_outputs['numerical'] - target[:, :nn_]) ** 2) / b
    cat_loss = jnp.float32(0.0)
    start = nn_
    for f, info in module.categorical_cardinality.items():
        if f in decoded_outputs:
            c = info['cardinality']
            pred = decoded_outputs[f]
            tgt_idx = jnp.argmax(target[:, start:start + c], axis=1)
            lp = jnp.log(jnp.clip(pred, 1e-8, 1.0 - 1e-8))
            lse = jax.scipy.special.logsumexp(lp, axis=1)
            picked = jnp.take_along_axis(lp, tgt_idx[:, None], axis=1)[:, 0]
            cat_loss = cat_loss + jnp.sum(lse - picked)
            start += c
    cat_loss = cat_loss / b
    kl = -0.5 * jnp.sum(1.0 + logvar - mu ** 2 - jnp.exp(logvar))
    kl = kl / (b * module.latent_dim)
    if module.latent_dim > 8:
        kl = kl * (1.0 / math.log(module.latent_dim))
    total = module.reconstruction_weight * (num_loss + cat_loss) \
        + beta * module.kl_weight * kl
    return total, num_loss, cat_loss, kl


if __name__ == "__main__":
    key = jax.random.PRNGKey(0)
    batch = 8
    num_numerical = 8
    latent_dim = 2
    categorical_cardinality = {
        "cat_a": {"cardinality": 4},
        "cat_b": {"cardinality": 6},
    }

    k1, k2, k3, k4, k5, k6, k7 = jax.random.split(key, 7)

    # Target: numerical features + concatenated one-hot categorical features.
    numerical_target = jax.random.normal(k1, (batch, num_numerical), jnp.float32)
    idx_a = jax.random.randint(k2, (batch,), 0, 4)
    idx_b = jax.random.randint(k3, (batch,), 0, 6)
    onehot_a = jax.nn.one_hot(idx_a, 4, dtype=jnp.float32)
    onehot_b = jax.nn.one_hot(idx_b, 6, dtype=jnp.float32)
    target = jnp.concatenate([numerical_target, onehot_a, onehot_b], axis=1)  # [8, 18]

    # Decoded outputs: numerical reconstruction + per-feature probability vectors.
    decoded_outputs = {
        "numerical": jax.random.normal(k4, (batch, num_numerical), jnp.float32),
        "cat_a": jax.nn.softmax(jax.random.normal(k5, (batch, 4), jnp.float32), axis=1),
        "cat_b": jax.nn.softmax(jax.random.normal(k6, (batch, 6), jnp.float32), axis=1),
    }

    mu = 0.5 * jax.random.normal(k7, (batch, latent_dim), jnp.float32)
    logvar = 0.1 * jax.random.normal(jax.random.fold_in(key, 99),
                                     (batch, latent_dim), jnp.float32)

    beta = 0.7

    # --- test 1: with categorical features ---
    loss_mod = EnhancedVAELossPallas(categorical_cardinality, num_numerical,
                                     latent_dim=latent_dim,
                                     reconstruction_weight=1.0, kl_weight=1.0)
    total, num_l, cat_l, kl_l = loss_mod(decoded_outputs, target, mu, logvar, beta=beta)
    total = jax.block_until_ready(total)
    got = jnp.stack([total, num_l, cat_l, kl_l])
    want = jnp.stack(_reference_loss(loss_mod, decoded_outputs, target, mu,
                                     logvar, beta=beta))
    assert jnp.allclose(got, want, rtol=1e-4, atol=1e-4), (got, want)

    # --- test 2: numerical-only (no categorical features) ---
    loss_mod2 = EnhancedVAELossPallas({}, num_numerical, latent_dim=latent_dim,
                                      reconstruction_weight=1.0, kl_weight=1.0)
    dec2 = {"numerical": decoded_outputs["numerical"]}
    tgt2 = numerical_target
    total2, num2, cat2, kl2 = loss_mod2(dec2, tgt2, mu, logvar, beta=beta)
    total2 = jax.block_until_ready(total2)
    got2 = jnp.stack([total2, num2, cat2, kl2])
    want2 = jnp.stack(_reference_loss(loss_mod2, dec2, tgt2, mu, logvar, beta=beta))
    assert jnp.allclose(got2, want2, rtol=1e-4, atol=1e-4), (got2, want2)

    print("KERNEL_OK")
</pallas_src>

<mosaic_0001>
module attributes {stable_mosaic.version = 11 : i64} {
  func.func @kernel(%arg0: i32, %arg1: memref<1xf32, #tpu.memory_space<smem>>, %arg2: memref<8x8xf32, #tpu.memory_space<vmem>>, %arg3: memref<8x8xf32, #tpu.memory_space<vmem>>, %arg4: memref<8x128xf32, #tpu.memory_space<vmem>>, %arg5: memref<8x128xf32, #tpu.memory_space<vmem>>, %arg6: memref<128x128xf32, #tpu.memory_space<vmem>>, %arg7: memref<8x2xf32, #tpu.memory_space<vmem>>, %arg8: memref<8x2xf32, #tpu.memory_space<vmem>>, %arg9: memref<4xf32, #tpu.memory_space<smem>>, %arg10: memref<4xf32, #tpu.memory_space<smem>>) attributes {dimension_semantics = [#tpu.dimension_semantics<arbitrary>], iteration_bounds = array<i64: 1>, scalar_prefetch = 0 : i64, scratch_operands = 1 : i64, tpu.core_type = #tpu.core_type<tc>, window_params = [{transform_indices = @transform_0, window_bounds = array<i64: 1>}, {transform_indices = @transform_1, window_bounds = array<i64: 8, 8>}, {transform_indices = @transform_2, window_bounds = array<i64: 8, 8>}, {transform_indices = @transform_3, window_bounds = array<i64: 8, 128>}, {transform_indices = @transform_4, window_bounds = array<i64: 8, 128>}, {pipeline_mode = #tpu.pipeline_mode<synchronous>, transform_indices = @transform_5, window_bounds = array<i64: 128, 128>}, {transform_indices = @transform_6, window_bounds = array<i64: 8, 2>}, {transform_indices = @transform_7, window_bounds = array<i64: 8, 2>}, {transform_indices = @transform_8, window_bounds = array<i64: 4>}]} {
    %c0_i32 = arith.constant 0 : i32
    %0 = arith.cmpi eq, %arg0, %c0_i32 : i32
    %1 = arith.extui %0 : i1 to i32
    %c0_i32_0 = arith.constant 0 : i32
    %2 = arith.cmpi ne, %1, %c0_i32_0 : i32
    scf.if %2 {
      %cst_29 = arith.constant 0.000000e+00 : f32
      %c0_30 = arith.constant 0 : index
      %60 = memref.load %arg10[%c0_30] : memref<4xf32, #tpu.memory_space<smem>>
      memref.store %cst_29, %arg10[%c0_30] : memref<4xf32, #tpu.memory_space<smem>>
      %cst_31 = arith.constant 0.000000e+00 : f32
      %c1_32 = arith.constant 1 : index
      %61 = memref.load %arg10[%c1_32] : memref<4xf32, #tpu.memory_space<smem>>
      memref.store %cst_31, %arg10[%c1_32] : memref<4xf32, #tpu.memory_space<smem>>
      %cst_33 = arith.constant 0.000000e+00 : f32
      %c2_34 = arith.constant 2 : index
      %62 = memref.load %arg10[%c2_34] : memref<4xf32, #tpu.memory_space<smem>>
      memref.store %cst_33, %arg10[%c2_34] : memref<4xf32, #tpu.memory_space<smem>>
    } else {
    }
    %c0 = arith.constant 0 : index
    %c0_1 = arith.constant 0 : index
    %3 = vector.load %arg2[%c0, %c0_1] : memref<8x8xf32, #tpu.memory_space<vmem>>, vector<8x8xf32>
    %c0_2 = arith.constant 0 : index
    %c0_3 = arith.constant 0 : index
    %4 = vector.load %arg3[%c0_2, %c0_3] : memref<8x8xf32, #tpu.memory_space<vmem>>, vector<8x8xf32>
    %5 = arith.subf %3, %4 : vector<8x8xf32>
    %6 = arith.mulf %5, %5 : vector<8x8xf32>
    %7 = vector.shape_cast %6 : vector<8x8xf32> to vector<1x8x8xf32>
    %cst = arith.constant dense<0.000000e+00> : vector<1xf32>
    %8 = vector.multi_reduction <add>, %7, %cst [1, 2] : vector<1x8x8xf32> to vector<1xf32>
    %9 = vector.shape_cast %8 : vector<1xf32> to vector<1x1x1xf32>
    %10 = vector.extract %9[0, 0, 0] : f32 from vector<1x1x1xf32>
    %c0_4 = arith.constant 0 : index
    %c0_5 = arith.constant 0 : index
    %11 = vector.load %arg4[%c0_4, %c0_5] : memref<8x128xf32, #tpu.memory_space<vmem>>, vector<8x128xf32>
    %cst_6 = arith.constant 9.99999993E-9 : f32
    %cst_7 = arith.constant 1.000000e+00 : f32
    %12 = vector.broadcast %cst_6 : f32 to vector<8x128xf32>
    %13 = arith.maximumf %12, %11 : vector<8x128xf32>
    %14 = vector.broadcast %cst_7 : f32 to vector<8x128xf32>
    %15 = arith.minimumf %14, %13 : vector<8x128xf32>
    %c0_8 = arith.constant 0 : index
    %c0_9 = arith.constant 0 : index
    %16 = vector.load %arg5[%c0_8, %c0_9] : memref<8x128xf32, #tpu.memory_space<vmem>>, vector<8x128xf32>
    %c0_10 = arith.constant 0 : index
    %c0_11 = arith.constant 0 : index
    %17 = vector.load %arg6[%c0_10, %c0_11] : memref<128x128xf32, #tpu.memory_space<vmem>>, vector<128x128xf32>
    %cst_12 = arith.constant dense<0.000000e+00> : vector<8x128xf32>
    %18 = tpu.matmul %15, %17, %cst_12 {dimension_numbers = #tpu.dot_dimension_numbers<[1], [0], [0], [1], [0, 0, 1, 1], [], []>} : vector<8x128xf32>, vector<128x128xf32>, vector<8x128xf32> -> vector<8x128xf32>
    %19 = arith.mulf %16, %15 : vector<8x128xf32>
    %cst_13 = arith.constant dense<0.000000e+00> : vector<8x128xf32>
    %20 = tpu.matmul %19, %17, %cst_13 {dimension_numbers = #tpu.dot_dimension_numbers<[1], [0], [0], [1], [0, 0, 1, 1], [], []>} : vector<8x128xf32>, vector<128x128xf32>, vector<8x128xf32> -> vector<8x128xf32>
    %21 = tpu.iota {dimensions = array<i32: 1>} : vector<8x128xi32>
    %c2_i32 = arith.constant 2 : i32
    %22 = vector.broadcast %c2_i32 : i32 to vector<8x128xi32>
    %23 = arith.cmpi slt, %21, %22 : vector<8x128xi32>
    %cst_14 = arith.constant 0.000000e+00 : f32
    %cst_15 = arith.constant 1.000000e+00 : f32
    %24 = vector.broadcast %cst_14 : f32 to vector<8x128xf32>
    %25 = vector.broadcast %cst_15 : f32 to vector<8x128xf32>
    %26 = arith.select %23, %24, %25 : vector<8x128xi1>, vector<8x128xf32>
    %27 = arith.addf %18, %26 : vector<8x128xf32>
    %28 = math.log %27 : vector<8x128xf32>
    %29 = arith.addf %20, %26 : vector<8x128xf32>
    %30 = math.log %29 : vector<8x128xf32>
    %31 = arith.subf %28, %30 : vector<8x128xf32>
    %32 = vector.shape_cast %31 : vector<8x128xf32> to vector<1x8x128xf32>
    %cst_16 = arith.constant dense<0.000000e+00> : vector<1xf32>
    %33 = vector.multi_reduction <add>, %32, %cst_16 [1, 2] : vector<1x8x128xf32> to vector<1xf32>
    %34 = vector.shape_cast %33 : vector<1xf32> to vector<1x1x1xf32>
    %35 = vector.extract %34[0, 0, 0] : f32 from vector<1x1x1xf32>
    %c0_17 = arith.constant 0 : index
    %c0_18 = arith.constant 0 : index
    %36 = vector.load %arg7[%c0_17, %c0_18] : memref<8x2xf32, #tpu.memory_space<vmem>>, vector<8x2xf32>
    %c0_19 = arith.constant 0 : index
    %c0_20 = arith.constant 0 : index
    %37 = vector.load %arg8[%c0_19, %c0_20] : memref<8x2xf32, #tpu.memory_space<vmem>>, vector<8x2xf32>
    %cst_21 = arith.constant 1.000000e+00 : f32
    %38 = vector.broadcast %cst_21 : f32 to vector<8x2xf32>
    %39 = arith.addf %38, %37 : vector<8x2xf32>
    %40 = arith.mulf %36, %36 : vector<8x2xf32>
    %41 = arith.subf %39, %40 : vector<8x2xf32>
    %42 = math.exp %37 : vector<8x2xf32>
    %43 = arith.subf %41, %42 : vector<8x2xf32>
    %44 = vector.shape_cast %43 : vector<8x2xf32> to vector<1x8x2xf32>
    %cst_22 = arith.constant dense<0.000000e+00> : vector<1xf32>
    %45 = vector.multi_reduction <add>, %44, %cst_22 [1, 2] : vector<1x8x2xf32> to vector<1xf32>
    %46 = vector.shape_cast %45 : vector<1xf32> to vector<1x1x1xf32>
    %47 = vector.extract %46[0, 0, 0] : f32 from vector<1x1x1xf32>
    %c0_23 = arith.constant 0 : index
    %48 = memref.load %arg10[%c0_23] : memref<4xf32, #tpu.memory_space<smem>>
    %49 = arith.addf %48, %10 : f32
    %c0_24 = arith.constant 0 : index
    %50 = memref.load %arg10[%c0_24] : memref<4xf32, #tpu.memory_space<smem>>
    memref.store %49, %arg10[%c0_24] : memref<4xf32, #tpu.memory_space<smem>>
    %c1 = arith.constant 1 : index
    %51 = memref.load %arg10[%c1] : memref<4xf32, #tpu.memory_space<smem>>
    %52 = arith.addf %51, %35 : f32
    %c1_25 = arith.constant 1 : index
    %53 = memref.load %arg10[%c1_25] : memref<4xf32, #tpu.memory_space<smem>>
    memref.store %52, %arg10[%c1_25] : memref<4xf32, #tpu.memory_space<smem>>
    %c2 = arith.constant 2 : index
    %54 = memref.load %arg10[%c2] : memref<4xf32, #tpu.memory_space<smem>>
    %55 = arith.addf %54, %47 : f32
    %c2_26 = arith.constant 2 : index
    %56 = memref.load %arg10[%c2_26] : memref<4xf32, #tpu.memory_space<smem>>
    memref.store %55, %arg10[%c2_26] : memref<4xf32, #tpu.memory_space<smem>>
    %c0_i32_27 = arith.constant 0 : i32
    %57 = arith.cmpi eq, %arg0, %c0_i32_27 : i32
    %58 = arith.extui %57 : i1 to i32
    %c0_i32_28 = arith.constant 0 : i32
    %59 = arith.cmpi ne, %58, %c0_i32_28 : i32
    scf.if %59 {
      %c0_29 = arith.constant 0 : index
      %60 = memref.load %arg10[%c0_29] : memref<4xf32, #tpu.memory_space<smem>>
      %cst_30 = arith.constant 1.250000e-01 : f32
      %61 = arith.mulf %60, %cst_30 : f32
      %c1_31 = arith.constant 1 : index
      %62 = memref.load %arg10[%c1_31] : memref<4xf32, #tpu.memory_space<smem>>
      %cst_32 = arith.constant 1.250000e-01 : f32
      %63 = arith.mulf %62, %cst_32 : f32
      %c2_33 = arith.constant 2 : index
      %64 = memref.load %arg10[%c2_33] : memref<4xf32, #tpu.memory_space<smem>>
      %cst_34 = arith.constant -5.000000e-01 : f32
      %65 = arith.mulf %cst_34, %64 : f32
      %cst_35 = arith.constant 6.250000e-02 : f32
      %66 = arith.mulf %65, %cst_35 : f32
      %cst_36 = arith.constant 1.000000e+00 : f32
      %67 = arith.mulf %66, %cst_36 : f32
      %68 = arith.addf %61, %63 : f32
      %cst_37 = arith.constant 1.000000e+00 : f32
      %69 = arith.mulf %cst_37, %68 : f32
      %c0_38 = arith.constant 0 : index
      %70 = memref.load %arg1[%c0_38] : memref<1xf32, #tpu.memory_space<smem>>
      %cst_39 = arith.constant 1.500000e+00 : f32
      %71 = arith.mulf %70, %cst_39 : f32
      %72 = arith.mulf %71, %67 : f32
      %73 = arith.addf %69, %72 : f32
      %c0_40 = arith.constant 0 : index
      %74 = memref.load %arg9[%c0_40] : memref<4xf32, #tpu.memory_space<smem>>
      memref.store %73, %arg9[%c0_40] : memref<4xf32, #tpu.memory_space<smem>>
      %c1_41 = arith.constant 1 : index
      %75 = memref.load %arg9[%c1_41] : memref<4xf32, #tpu.memory_space<smem>>
      memref.store %61, %arg9[%c1_41] : memref<4xf32, #tpu.memory_space<smem>>
      %c2_42 = arith.constant 2 : index
      %76 = memref.load %arg9[%c2_42] : memref<4xf32, #tpu.memory_space<smem>>
      memref.store %63, %arg9[%c2_42] : memref<4xf32, #tpu.memory_space<smem>>
      %c3 = arith.constant 3 : index
      %77 = memref.load %arg9[%c3] : memref<4xf32, #tpu.memory_space<smem>>
      memref.store %67, %arg9[%c3] : memref<4xf32, #tpu.memory_space<smem>>
    } else {
    }
    return
  }
  func.func @transform_0(%arg0: i32) -> i32 {
    %c0_i32 = arith.constant 0 : i32
    %c0_i32_0 = arith.constant 0 : i32
    return %c0_i32 : i32
  }
  func.func @transform_1(%arg0: i32) -> (i32, i32) {
    %c0_i32 = arith.constant 0 : i32
    %c0_i32_0 = arith.constant 0 : i32
    return %arg0, %c0_i32 : i32, i32
  }
  func.func @transform_2(%arg0: i32) -> (i32, i32) {
    %c0_i32 = arith.constant 0 : i32
    %c0_i32_0 = arith.constant 0 : i32
    return %arg0, %c0_i32 : i32, i32
  }
  func.func @transform_3(%arg0: i32) -> (i32, i32) {
    %c0_i32 = arith.constant 0 : i32
    %c0_i32_0 = arith.constant 0 : i32
    return %arg0, %c0_i32 : i32, i32
  }
  func.func @transform_4(%arg0: i32) -> (i32, i32) {
    %c0_i32 = arith.constant 0 : i32
    %c0_i32_0 = arith.constant 0 : i32
    return %arg0, %c0_i32 : i32, i32
  }
  func.func @transform_5(%arg0: i32) -> (i32, i32) {
    %c0_i32 = arith.constant 0 : i32
    %c0_i32_0 = arith.constant 0 : i32
    %c0_i32_1 = arith.constant 0 : i32
    return %c0_i32, %c0_i32_0 : i32, i32
  }
  func.func @transform_6(%arg0: i32) -> (i32, i32) {
    %c0_i32 = arith.constant 0 : i32
    %c0_i32_0 = arith.constant 0 : i32
    return %arg0, %c0_i32 : i32, i32
  }
  func.func @transform_7(%arg0: i32) -> (i32, i32) {
    %c0_i32 = arith.constant 0 : i32
    %c0_i32_0 = arith.constant 0 : i32
    return %arg0, %c0_i32 : i32, i32
  }
  func.func @transform_8(%arg0: i32) -> i32 {
    %c0_i32 = arith.constant 0 : i32
    %c0_i32_0 = arith.constant 0 : i32
    return %c0_i32 : i32
  }
}

</mosaic_0001>

<llo_original>
// kernel: tpu_custom_call.1
$region0: #{tpu_custom_call.1}
  #allocation0 [shape = 'u32[]', space=smem, size = 0x4, offset = 0x4, fixed_abs, tag = 'smem constant byte address 0x4 - core index']
  #allocation1 [shape = 'u32[72,128]{1,0:T(1,128)}', space=vmem, size = 0x9000, scoped, tag = 'internal scratch']
  #allocation2 [shape = 'f32[4]{0:T(128)}', space=smem, size = 0x200, scoped, tag = 'scratch operand']
  #allocation3 [shape = 'f32[1]{0:T(128)S(6)}', space=smem, size = 0x200, scoped, tag = 'scoped memory for tpu_custom_call.1']
  %s0 = inlined_call_operand.<no memory space> [shape: f32[1], index: 0, kind: input, shape index: {}]
  %s1 = inlined_call_operand.vmem [shape: f32[8,8], index: 1, kind: input, shape index: {}]
  %s2 = inlined_call_operand.vmem [shape: f32[8,8], index: 2, kind: input, shape index: {}]
  %s3 = inlined_call_operand.hbm [shape: f32[8,128], index: 3, kind: input, shape index: {}]
  %s4 = inlined_call_operand.hbm [shape: f32[8,128], index: 4, kind: input, shape index: {}]
  %s5 = inlined_call_operand.hbm [shape: f32[128,128], index: 5, kind: input, shape index: {}]
  %s6 = inlined_call_operand.vmem [shape: f32[8,2], index: 6, kind: input, shape index: {}]
  %s7 = inlined_call_operand.vmem [shape: f32[8,2], index: 7, kind: input, shape index: {}]
  %s8 = inlined_call_operand.hbm [shape: f32[4], index: 8, kind: output, shape index: {}]
  %s9 = sld [smem:[#allocation0]]
  $region62: #{tpu_custom_call.1} parent=0
    _
  %s11 = ssub.s32 1, %s9
  %s12 = scalar_select 0, %s11, %s9
  %13 = sst [smem:[#allocation3]] %s0
  $region1: #{tpu_custom_call.1} parent=0
    #allocation4 [shape = 'u8[4096]{0}', space=vmem, size = 0x1000, scoped, tag = 'input window, operand 3, single buffered']
    #allocation5 [shape = 's32[1]{0}', space=sflag, size = 0x4, scoped, tag = 'scoped memory for tpu_custom_call.1']
    #allocation6 [shape = 's32[1]{0}', space=sflag, size = 0x4, scoped, tag = 'scoped memory for tpu_custom_call.1']
    #allocation7 [shape = 'u8[4096]{0}', space=vmem, size = 0x1000, scoped, tag = 'input window, operand 4, single buffered']
    #allocation8 [shape = 's32[1]{0}', space=sflag, size = 0x4, scoped, tag = 'scoped memory for tpu_custom_call.1']
    #allocation9 [shape = 'u8[65536]{0}', space=vmem, size = 0x10000, scoped, tag = 'input window, operand 5, single buffered']
    #allocation10 [shape = 'u8[512]{0}', space=smem, size = 0x200, scoped, tag = 'output window, operand 0, single buffered']
    %14 = vsyncpa [#allocation5], 0
    %15 = vsyncpa [#allocation8], 0
    %16 = vsyncpa [#allocation6], 0
    // Predicated region
    $region2: #{tpu_custom_call.1} parent=1 // pred_check
      _
    $region3: #{tpu_custom_call.1} parent=1 // pred_check_branch
      %18 = sbr.rel (0) target = $region5
    $region4: #{tpu_custom_call.1} parent=1 // pred_region
      _
    $region5: #{tpu_custom_call.1} parent=1 // pred_fallthru
      _
    // Predicated region
    $region6: #{tpu_custom_call.1} parent=1 // pred_check
      _
    $region7: #{tpu_custom_call.1} parent=1 // pred_check_branch
      %20 = sbr.rel (0) target = $region9
    $region8: #{tpu_custom_call.1} parent=1 // pred_region
      _
    $region9: #{tpu_custom_call.1} parent=1 // pred_fallthru
      _
    // Predicated region
    $region10: #{tpu_custom_call.1} parent=1 // pred_check
      _
    $region11: #{tpu_custom_call.1} parent=1 // pred_check_branch
      %22 = sbr.rel (0) target = $region13
    $region12: #{tpu_custom_call.1} parent=1 // pred_region
      _
    $region13: #{tpu_custom_call.1} parent=1 // pred_fallthru
      _
    // Predicated region
    $region14: #{tpu_custom_call.1} parent=1 // pred_check
      _
    $region15: #{tpu_custom_call.1} parent=1 // pred_check_branch
      %24 = sbr.rel (0) target = $region17
    $region16: #{tpu_custom_call.1} parent=1 // pred_region
      %26 = vsyncadd [#allocation5], 0
      %s28 = sshll.u32 %s3, 4
      %s29 = int_to_ptr.hbm [resolvable:$true] %s28
      %s30 = sshll.u32 [#allocation4], 4
      %s31 = int_to_ptr.vmem [resolvable:$true] %s30
      %33 = dma.hbm_to_vmem [thread:$0]  %s29, 128, %s31, [#allocation5]
    $region17: #{tpu_custom_call.1} parent=1 // pred_fallthru
      _
    // Predicated region
    $region18: #{tpu_custom_call.1} parent=1 // pred_check
      _
    $region19: #{tpu_custom_call.1} parent=1 // pred_check_branch
      %35 = sbr.rel (0) target = $region21
    $region20: #{tpu_custom_call.1} parent=1 // pred_region
      %37 = vsyncadd [#allocation8], 0
      %s39 = sshll.u32 %s4, 4
      %s40 = int_to_ptr.hbm [resolvable:$true] %s39
      %s41 = sshll.u32 [#allocation7], 4
      %s42 = int_to_ptr.vmem [resolvable:$true] %s41
      %44 = dma.hbm_to_vmem [thread:$0]  %s40, 128, %s42, [#allocation8]
    $region21: #{tpu_custom_call.1} parent=1 // pred_fallthru
      _
    // Predicated region
    $region22: #{tpu_custom_call.1} parent=1 // pred_check
      _
    $region23: #{tpu_custom_call.1} parent=1 // pred_check_branch
      %46 = sbr.rel (0) target = $region25
    $region24: #{tpu_custom_call.1} parent=1 // pred_region
      %48 = vsyncadd [#allocation8], 0
      %s49 = sshll.u32 %s5, 4
      %s50 = int_to_ptr.hbm [resolvable:$true] %s49
      %s51 = sshll.u32 [#allocation9], 4
      %s52 = int_to_ptr.vmem [resolvable:$true] %s51
      %57 = dma.hbm_to_vmem [thread:$0]  %s50, 2048, %s52, [#allocation8], 128, 128, 8
    $region25: #{tpu_custom_call.1} parent=1 // pred_fallthru
      _
    // Predicated region
    $region26: #{tpu_custom_call.1} parent=1 // pred_check
      _
    $region27: #{tpu_custom_call.1} parent=1 // pred_check_branch
      %59 = sbr.rel (0) target = $region29
    $region28: #{tpu_custom_call.1} parent=1 // pred_region
      _
    $region29: #{tpu_custom_call.1} parent=1 // pred_fallthru
      _
    // Predicated region
    $region30: #{tpu_custom_call.1} parent=1 // pred_check
      _
    $region31: #{tpu_custom_call.1} parent=1 // pred_check_branch
      %61 = sbr.rel (0) target = $region33
    $region32: #{tpu_custom_call.1} parent=1 // pred_region
      _
    $region33: #{tpu_custom_call.1} parent=1 // pred_fallthru
      _
    // Predicated region
    $region34: #{tpu_custom_call.1} parent=1 // pred_check
      _
    $region35: #{tpu_custom_call.1} parent=1 // pred_check_branch
      %63 = sbr.rel (0) target = $region37
    $region36: #{tpu_custom_call.1} parent=1 // pred_region
      %65 = dma.done [#allocation5], 128
    $region37: #{tpu_custom_call.1} parent=1 // pred_fallthru
      _
    // Predicated region
    $region38: #{tpu_custom_call.1} parent=1 // pred_check
      _
    $region39: #{tpu_custom_call.1} parent=1 // pred_check_branch
      %67 = sbr.rel (0) target = $region41
    $region40: #{tpu_custom_call.1} parent=1 // pred_region
      %69 = dma.done [#allocation8], 128
    $region41: #{tpu_custom_call.1} parent=1 // pred_fallthru
      _
    // Predicated region
    $region42: #{tpu_custom_call.1} parent=1 // pred_check
      _
    $region43: #{tpu_custom_call.1} parent=1 // pred_check_branch
      %71 = sbr.rel (0) target = $region45
    $region44: #{tpu_custom_call.1} parent=1 // pred_region
      %73 = dma.done [#allocation8], 2048
    $region45: #{tpu_custom_call.1} parent=1 // pred_fallthru
      _
    %p74 = scmp.eq.s32.totalorder 0, 0
    // Predicated region
    $region46: #{tpu_custom_call.1} parent=1 // pred_check
      %p75 = pneg %p74
    $region47: #{tpu_custom_call.1} parent=1 // pred_check_branch
      %77 = sbr.rel (%p75) target = $region49
    $region48: #{tpu_custom_call.1} parent=1 // pred_region
      %s78 = scalar_lea.smem [#allocation2], 0
      %79 = sst [smem:[%s78]] 0.0
      %s80 = scalar_lea.smem [#allocation2], 1
      %81 = sst [smem:[%s80]] 0.0
      %s82 = scalar_lea.smem [#allocation2], 2
      %83 = sst [smem:[%s82]] 0.0
    $region49: #{tpu_custom_call.1} parent=1 // pred_fallthru
      _
    %v84 = vld [vmem:[%s1] sm:$0xff]
    %v85 = vld [vmem:[%s2] sm:$0xff]
    %v86 = vsub.f32 %v84, %v85
    %v87 = vmul.f32 %v86, %v86
    %vm88 = vcmask 64512
    %v89 = vsel %vm88, %v87, 0.0
    %90 = vadd.xlane.f32.xlu0 %v89
    %v91 = vpop.xlane.xlu0 %90
    %v92 = vrot.slane %v91, 4
    %v93 = vadd.f32 %v91, %v92
    %v94 = vrot.slane %v93, 2
    %v95 = vadd.f32 %v93, %v94
    %v96 = vrot.slane %v95, 1
    %v97 = vadd.f32 %v95, %v96
    %s98 = vtos %v97
    %v99 = vld [vmem:[#allocation4] sm:$0xff]
    %v100 = vmax.f32 %v99, 1e-08
    %v101 = vmin.f32 %v100, 1.0
    %v102 = vld [vmem:[#allocation7] sm:$0xff]
    %v103 = vld [vmem:[#allocation9] sm:$0xff]
    %v104 = vld [vmem:[#allocation9 + $0x8] sm:$0xff]
    %v105 = vld [vmem:[#allocation9 + $0x10] sm:$0xff]
    %v106 = vld [vmem:[#allocation9 + $0x18] sm:$0xff]
    %v107 = vld [vmem:[#allocation9 + $0x20] sm:$0xff]
    %v108 = vld [vmem:[#allocation9 + $0x28] sm:$0xff]
    %v109 = vld [vmem:[#allocation9 + $0x30] sm:$0xff]
    %v110 = vld [vmem:[#allocation9 + $0x38] sm:$0xff]
    %v111 = vld [vmem:[#allocation9 + $0x40] sm:$0xff]
    %v112 = vld [vmem:[#allocation9 + $0x48] sm:$0xff]
    %v113 = vld [vmem:[#allocation9 + $0x50] sm:$0xff]
    %v114 = vld [vmem:[#allocation9 + $0x58] sm:$0xff]
    %v115 = vld [vmem:[#allocation9 + $0x60] sm:$0xff]
    %v116 = vld [vmem:[#allocation9 + $0x68] sm:$0xff]
    %v117 = vld [vmem:[#allocation9 + $0x70] sm:$0xff]
    %v118 = vld [vmem:[#allocation9 + $0x78] sm:$0xff]
    %v119 = vmul.f32 %v102, %v101
    %v120 = vlaneseq
    %v121 = vand.u32 %v120, 127
    %vm122 = vcmp.lt.s32.totalorder %v121, 2
    %v123 = vsel %vm122, 0.0, 1.0
    %124 = vmatpush.msra.mxu0 %v118
    %125 = vmatpush.msra.mxu0 %v117
    %126 = vmatpush.msra.mxu0 %v116
    %127 = vmatpush.msra.mxu0 %v115
    %128 = vmatpush.msra.mxu0 %v114
    %129 = vmatpush.msra.mxu0 %v113
    %130 = vmatpush.msra.mxu0 %v112
    %131 = vmatpush.msra.mxu0 %v111
    %132 = vmatpush.msra.mxu0 %v110
    %133 = vmatpush.msra.mxu0 %v109
    %134 = vmatpush.msra.mxu0 %v108
    %135 = vmatpush.msra.mxu0 %v107
    %136 = vmatpush.msra.mxu0 %v106
    %137 = vmatpush.msra.mxu0 %v105
    %138 = vmatpush.msra.mxu0 %v104
    %139 = vmatpush.msra.mxu0 %v103
    %140 = vmatmul.f32.gmra.mxu0 %v101
    %v141 = vpop.f32.mrf.mxu0
    %v142 = vadd.f32 %v123, %v141
    %143 = vdwg.mxu0
    %v144 = vlog2.pop %v142
    %v145 = vmul.f32 %v144, 0.6931472
    %146 = vmatpush.msra.mxu0 %v118
    %147 = vmatpush.msra.mxu0 %v117
    %148 = vmatpush.msra.mxu0 %v116
    %149 = vmatpush.msra.mxu0 %v115
    %150 = vmatpush.msra.mxu0 %v114
    %151 = vmatpush.msra.mxu0 %v113
    %152 = vmatpush.msra.mxu0 %v112
    %153 = vmatpush.msra.mxu0 %v111
    %154 = vmatpush.msra.mxu0 %v110
    %155 = vmatpush.msra.mxu0 %v109
    %156 = vmatpush.msra.mxu0 %v108
    %157 = vmatpush.msra.mxu0 %v107
    %158 = vmatpush.msra.mxu0 %v106
    %159 = vmatpush.msra.mxu0 %v105
    %160 = vmatpush.msra.mxu0 %v104
    %161 = vmatpush.msra.mxu0 %v103
    %162 = vmatmul.f32.gmra.mxu0 %v119
    %v163 = vpop.f32.mrf.mxu0
    %v164 = vadd.f32 %v123, %v163
    %165 = vdwg.mxu0
    %v166 = vlog2.pop %v164
    %v167 = vmul.f32 %v166, 0.6931472
    %v168 = vsub.f32 %v145, %v167
    %169 = vadd.xlane.f32.xlu0 %v168
    %v170 = vpop.xlane.xlu0 %169
    %v171 = vrot.slane %v170, 4
    %v172 = vadd.f32 %v170, %v171
    %v173 = vrot.slane %v172, 2
    %v174 = vadd.f32 %v172, %v173
    %v175 = vrot.slane %v174, 1
    %v176 = vadd.f32 %v174, %v175
    %s177 = vtos %v176
    %v178 = vld [vmem:[%s6] sm:$0xff]
    %v179 = vld [vmem:[%s7] sm:$0xff]
    %v180 = vadd.f32 %v179, 1.0
    %v181 = vmul.f32 %v178, %v178
    %v182 = vsub.f32 %v180, %v181
    %v183 = vmul.f32 %v179, 1.442695
    %v184 = vpow.pop %v183
    %v185 = vsub.f32 %v182, %v184
    %vm186 = vcmask 15360
    %v187 = vsel %vm186, %v185, 0.0
    %188 = vadd.xlane.f32.xlu0 %v187
    %v189 = vpop.xlane.xlu0 %188
    %v190 = vrot.slane %v189, 4
    %v191 = vadd.f32 %v189, %v190
    %v192 = vrot.slane %v191, 2
    %v193 = vadd.f32 %v191, %v192
    %v194 = vrot.slane %v193, 1
    %v195 = vadd.f32 %v193, %v194
    %s196 = vtos %v195
    %s197 = sld [smem:[#allocation2]]
    %s198 = sadd.f32 %s197, %s98
    %s199 = scalar_lea.smem [#allocation2], 0
    %200 = sst [smem:[%s199]] %s198
    %s201 = sld [smem:[#allocation2 + $0x1]]
    %s202 = sadd.f32 %s201, %s177
    %s203 = scalar_lea.smem [#allocation2], 1
    %204 = sst [smem:[%s203]] %s202
    %s205 = sld [smem:[#allocation2 + $0x2]]
    %s206 = sadd.f32 %s205, %s196
    %s207 = scalar_lea.smem [#allocation2], 2
    %208 = sst [smem:[%s207]] %s206
    // Predicated region
    $region50: #{tpu_custom_call.1} parent=1 // pred_check
      %p209 = pneg %p74
    $region51: #{tpu_custom_call.1} parent=1 // pred_check_branch
      %211 = sbr.rel (%p209) target = $region53
    $region52: #{tpu_custom_call.1} parent=1 // pred_region
      %s212 = sld [smem:[#allocation2]]
      %s213 = smul.f32 %s212, 0.125
      %s214 = sld [smem:[#allocation2 + $0x1]]
      %s215 = smul.f32 %s214, 0.125
      %s216 = sld [smem:[#allocation2 + $0x2]]
      %s217 = smul.f32 %s216, -0.5
      %s218 = smul.f32 %s217, 0.0625
      %s219 = sadd.f32 %s213, %s215
      %s220 = sld [smem:[#allocation3]]
      %s221 = smul.f32 %s220, 1.5
      %s222 = smul.f32 %s221, %s218
      %s223 = sadd.f32 %s219, %s222
      %s224 = scalar_lea.smem [#allocation10], 0
      %225 = sst [smem:[%s224]] %s223
      %s226 = scalar_lea.smem [#allocation10], 1
      %227 = sst [smem:[%s226]] %s213
      %s228 = scalar_lea.smem [#allocation10], 2
      %229 = sst [smem:[%s228]] %s215
      %s230 = scalar_lea.smem [#allocation10], 3
      %231 = sst [smem:[%s230]] %s218
    $region53: #{tpu_custom_call.1} parent=1 // pred_fallthru
      _
    // Predicated region
    $region54: #{tpu_custom_call.1} parent=1 // pred_check
      _
    $region55: #{tpu_custom_call.1} parent=1 // pred_check_branch
      %233 = sbr.rel (0) target = $region57
    $region56: #{tpu_custom_call.1} parent=1 // pred_region
      %235 = vsyncadd [#allocation6], 0
      %s237 = sshll.u32 %s8, 4
      %s238 = int_to_ptr.hbm [resolvable:$true] %s237
      %240 = dma.smem_to_hbm [#allocation10], 16, %s238, [#allocation6]
    $region57: #{tpu_custom_call.1} parent=1 // pred_fallthru
      _
    // Predicated region
    $region58: #{tpu_custom_call.1} parent=1 // pred_check
      _
    $region59: #{tpu_custom_call.1} parent=1 // pred_check_branch
      %242 = sbr.rel (0) target = $region61
    $region60: #{tpu_custom_call.1} parent=1 // pred_region
      %244 = dma.done [#allocation6], 16
    $region61: #{tpu_custom_call.1} parent=1 // pred_fallthru
      _
    %245 = sfence
    %246 = vsyncpa [#allocation5], 1
    %247 = vsyncpa [#allocation8], 1
    %248 = vsyncpa [#allocation6], 1

</llo_original>
